<compile_context>
chip_gen: v7x
topology: tpu7x:2x2x1
jax: 0.10.0
libtpu: 0.0.40
codegen_flags: <defaults>
</compile_context>

<pallas_src>
import numpy as np
import jax
import jax.numpy as jnp
from jax.experimental import pallas as pl
from jax.experimental.pallas import tpu as pltpu


def _round_up(x, m):
    return pl.cdiv(x, m) * m


def feature_conv_kernel(x_ref, w_ref, b_ref, o_ref):
    # x_ref : (C_in, TL)    lane-dense input tile
    # w_ref : (C_out, C_in) BN-folded conv1d (k=1) weight, resident across grid
    # b_ref : (C_out, 1)    BN-folded bias (f32), resident across grid
    # o_ref : (C_out, TL)
    y = jnp.dot(w_ref[...], x_ref[...], preferred_element_type=jnp.float32)
    y = y + b_ref[...]
    o_ref[...] = jnp.maximum(y, 0.0).astype(o_ref.dtype)


def _pick_tile(C_in, C_out, itemsize, max_tl, stream_budget_bytes):
    # Double-buffered streamed in/out tiles cost ~ 2*(C_in+C_out)*tl*itemsize bytes.
    per_lane = 2 * (C_in + C_out) * itemsize
    tl = max(128, (stream_budget_bytes // per_lane) // 128 * 128)
    return int(min(max_tl, tl))


def _compiler_params(C_in, C_out, tl, itemsize, semantics):
    # Explicit VMEM limit from the actual footprint: streamed tiles (double-buffered)
    # + resident weight/bias (padded to (8,128) tiles) + headroom. Capped at 48 MiB so it
    # stays inside v7x's 64 MiB physical VMEM while still unlocking v5e's 16 MiB default.
    stream_bytes = 2 * (C_in + C_out) * tl * itemsize
    resident_bytes = 2 * (_round_up(C_out, 8) * _round_up(C_in, 128) + 8 * 128) * 4
    limit = int(stream_bytes + resident_bytes + (8 << 20))
    limit = min(max(limit, 16 << 20), 48 << 20)
    return pltpu.CompilerParams(dimension_semantics=semantics,
                                vmem_limit_bytes=limit)


def _feature_conv_direct(x, w, b, tl):
    """L >= 128: index (N, C_in, L) directly; output written straight to (N, C_out, L)."""
    N, C_in, L = x.shape
    C_out = w.shape[0]
    itemsize = jnp.dtype(x.dtype).itemsize

    tl = min(tl, _round_up(L, 128))
    n_l = pl.cdiv(L, tl)
    # Keep >= 2 grid steps when possible so v7x's 2 TensorCores both get work.
    if N * n_l < 2 and L >= 256:
        tl = _round_up(pl.cdiv(L, 2), 128)
        n_l = pl.cdiv(L, tl)

    return pl.pallas_call(
        feature_conv_kernel,
        out_shape=jax.ShapeDtypeStruct((N, C_out, L), x.dtype),
        grid_spec=pltpu.PrefetchScalarGridSpec(
            num_scalar_prefetch=0,
            grid=(N, n_l),
            in_specs=[
                pl.BlockSpec((None, C_in, tl), lambda n, j: (n, 0, j)),
                pl.BlockSpec((C_out, C_in), lambda n, j: (0, 0)),   # resident
                pl.BlockSpec((C_out, 1), lambda n, j: (0, 0)),      # resident
            ],
            out_specs=pl.BlockSpec((None, C_out, tl), lambda n, j: (n, 0, j)),
        ),
        compiler_params=_compiler_params(C_in, C_out, tl, itemsize,
                                         ("parallel", "parallel")),
    )(x, w, b)


def _feature_conv_folded_lanes(x, w, b, tl):
    """Small-L fallback: collapse batch into the lane axis to keep lanes dense."""
    N, C_in, L = x.shape
    C_out = w.shape[0]
    itemsize = jnp.dtype(x.dtype).itemsize
    M = N * L

    x2 = jnp.transpose(x, (1, 0, 2)).reshape(C_in, M)

    tl = min(tl, _round_up(M, 128))
    if M >= 256 and pl.cdiv(M, tl) < 2:          # keep >= 2 grid steps when possible
        tl = _round_up(pl.cdiv(M, 2), 128)
    Mp = _round_up(M, tl)
    if Mp != M:
        x2 = jnp.pad(x2, ((0, 0), (0, Mp - M)))

    out2 = pl.pallas_call(
        feature_conv_kernel,
        out_shape=jax.ShapeDtypeStruct((C_out, Mp), x.dtype),
        grid_spec=pltpu.PrefetchScalarGridSpec(
            num_scalar_prefetch=0,
            grid=(Mp // tl,),
            in_specs=[
                pl.BlockSpec((C_in, tl), lambda j: (0, j)),
                pl.BlockSpec((C_out, C_in), lambda j: (0, 0)),   # resident
                pl.BlockSpec((C_out, 1), lambda j: (0, 0)),      # resident
            ],
            out_specs=pl.BlockSpec((C_out, tl), lambda j: (0, j)),
        ),
        compiler_params=_compiler_params(C_in, C_out, tl, itemsize, ("parallel",)),
    )(x2, w, b)

    out2 = out2[:, :M]
    return jnp.transpose(out2.reshape(C_out, N, L), (1, 0, 2))


def feature_conv(x, w_folded, b_folded, *, max_tl=2048, stream_budget_bytes=16 << 20):
    """x: (N, C_in, L); w_folded: (C_out, C_in); b_folded: (C_out, 1) f32."""
    N, C_in, L = x.shape
    C_out = w_folded.shape[0]
    itemsize = jnp.dtype(x.dtype).itemsize

    w = w_folded.astype(x.dtype)        # f32 stays f32; bf16 I/O only if x is bf16
    b = b_folded.astype(jnp.float32)    # bias/ReLU kept in f32 post-MXU

    tl = _pick_tile(C_in, C_out, itemsize, max_tl, stream_budget_bytes)

    if L >= 128:
        return _feature_conv_direct(x, w, b, tl)
    return _feature_conv_folded_lanes(x, w, b, tl)


def fold_featureconv_params(w, g1, be1, rm1, rv1, g2, be2, rm2, rv2, eps=1e-5):
    """Fold BN(in) -> Conv1d(k=1, no bias) -> BN(out) into (W_folded, b_folded), both f32."""
    s1 = g1 / jnp.sqrt(rv1 + eps)          # (C_in,)
    b1 = be1 - rm1 * s1                    # (C_in,)
    s2 = g2 / jnp.sqrt(rv2 + eps)          # (C_out,)
    b2 = be2 - rm2 * s2                    # (C_out,)
    w_folded = s2[:, None] * (w * s1[None, :])       # (C_out, C_in)
    b_folded = (s2 * (w @ b1) + b2)[:, None]          # (C_out, 1)
    return w_folded.astype(jnp.float32), b_folded.astype(jnp.float32)


def _reference(x, w, g1, be1, rm1, rv1, g2, be2, rm2, rv2, eps=1e-5):
    s1 = g1 / jnp.sqrt(rv1 + eps)
    b1 = be1 - rm1 * s1
    s2 = g2 / jnp.sqrt(rv2 + eps)
    b2 = be2 - rm2 * s2
    xn = x * s1[None, :, None] + b1[None, :, None]
    y = jnp.einsum("oc,ncl->nol", w, xn)
    return jnp.maximum(y * s2[None, :, None] + b2[None, :, None], 0.0)


if __name__ == "__main__":
    in_chn, out_chn = 4, 8
    N = 2

    key = jax.random.PRNGKey(0)
    keys = jax.random.split(key, 10)

    # Conv1d(in_chn, out_chn, kernel_size=1, bias=False) weight (squeezed to (C_out, C_in))
    w = jax.random.normal(keys[1], (out_chn, in_chn), dtype=jnp.float32) * (1.0 / np.sqrt(in_chn))

    # BatchNorm1d(in_chn) eval-mode parameters
    g1 = 1.0 + 0.1 * jax.random.normal(keys[2], (in_chn,), dtype=jnp.float32)
    be1 = 0.1 * jax.random.normal(keys[3], (in_chn,), dtype=jnp.float32)
    rm1 = 0.1 * jax.random.normal(keys[4], (in_chn,), dtype=jnp.float32)
    rv1 = jnp.abs(1.0 + 0.1 * jax.random.normal(keys[5], (in_chn,), dtype=jnp.float32))

    # BatchNorm1d(out_chn) eval-mode parameters
    g2 = 1.0 + 0.1 * jax.random.normal(keys[6], (out_chn,), dtype=jnp.float32)
    be2 = 0.1 * jax.random.normal(keys[7], (out_chn,), dtype=jnp.float32)
    rm2 = 0.05 * jax.random.normal(keys[8], (out_chn,), dtype=jnp.float32)
    rv2 = jnp.abs(1.0 + 0.1 * jax.random.normal(keys[9], (out_chn,), dtype=jnp.float32))

    w_folded, b_folded = fold_featureconv_params(w, g1, be1, rm1, rv1, g2, be2, rm2, rv2)

    # Case 1: small L (exercises the lane-folding fallback path).
    L_small = 16
    x_small = jax.random.normal(keys[0], (N, in_chn, L_small), dtype=jnp.float32)
    out_small = jax.block_until_ready(feature_conv(x_small, w_folded, b_folded))
    ref_small = _reference(x_small, w, g1, be1, rm1, rv1, g2, be2, rm2, rv2)
    np.testing.assert_allclose(np.asarray(out_small), np.asarray(ref_small),
                               rtol=1e-5, atol=1e-5)

    # Case 2: L >= 128 (exercises the direct (N, C_in, L) path with a 2-D grid).
    L_big = 256
    x_big = jax.random.normal(keys[0], (N, in_chn, L_big), dtype=jnp.float32)
    out_big = jax.block_until_ready(feature_conv(x_big, w_folded, b_folded))
    ref_big = _reference(x_big, w, g1, be1, rm1, rv1, g2, be2, rm2, rv2)
    np.testing.assert_allclose(np.asarray(out_big), np.asarray(ref_big),
                               rtol=1e-5, atol=1e-5)

    print("KERNEL_OK")
</pallas_src>

<mosaic_0001>
module attributes {stable_mosaic.version = 11 : i64} {
  func.func @feature_conv_kernel(%arg0: i32, %arg1: memref<4x128xf32, #tpu.memory_space<vmem>>, %arg2: memref<8x4xf32, #tpu.memory_space<vmem>>, %arg3: memref<8x1xf32, #tpu.memory_space<vmem>>, %arg4: memref<8x128xf32, #tpu.memory_space<vmem>>) attributes {dimension_semantics = [#tpu.dimension_semantics<parallel>], iteration_bounds = array<i64: 1>, scalar_prefetch = 0 : i64, scratch_operands = 0 : i64, tpu.core_type = #tpu.core_type<tc>, window_params = [{transform_indices = @transform_0, window_bounds = array<i64: 4, 128>}, {pipeline_mode = #tpu.pipeline_mode<synchronous>, transform_indices = @transform_1, window_bounds = array<i64: 8, 4>}, {pipeline_mode = #tpu.pipeline_mode<synchronous>, transform_indices = @transform_2, window_bounds = array<i64: 8, 1>}, {transform_indices = @transform_3, window_bounds = array<i64: 8, 128>}]} {
    %c0 = arith.constant 0 : index
    %c0_0 = arith.constant 0 : index
    %0 = vector.load %arg2[%c0, %c0_0] : memref<8x4xf32, #tpu.memory_space<vmem>>, vector<8x4xf32>
    %c0_1 = arith.constant 0 : index
    %c0_2 = arith.constant 0 : index
    %1 = vector.load %arg1[%c0_1, %c0_2] : memref<4x128xf32, #tpu.memory_space<vmem>>, vector<4x128xf32>
    %cst = arith.constant dense<0.000000e+00> : vector<8x128xf32>
    %2 = tpu.matmul %0, %1, %cst {dimension_numbers = #tpu.dot_dimension_numbers<[1], [0], [0], [1], [0, 0, 1, 1], [], []>} : vector<8x4xf32>, vector<4x128xf32>, vector<8x128xf32> -> vector<8x128xf32>
    %c0_3 = arith.constant 0 : index
    %c0_4 = arith.constant 0 : index
    %3 = vector.load %arg3[%c0_3, %c0_4] : memref<8x1xf32, #tpu.memory_space<vmem>>, vector<8x1xf32>
    %4 = vector.broadcast %3 : vector<8x1xf32> to vector<8x128xf32>
    %5 = arith.addf %2, %4 : vector<8x128xf32>
    %cst_5 = arith.constant 0.000000e+00 : f32
    %6 = vector.broadcast %cst_5 : f32 to vector<8x128xf32>
    %7 = arith.maximumf %5, %6 : vector<8x128xf32>
    %c0_6 = arith.constant 0 : index
    %c0_7 = arith.constant 0 : index
    %8 = vector.load %arg4[%c0_6, %c0_7] : memref<8x128xf32, #tpu.memory_space<vmem>>, vector<8x128xf32>
    tpu.vector_store %arg4[%c0_6, %c0_7], %7 {strides = array<i32>} : memref<8x128xf32, #tpu.memory_space<vmem>>, vector<8x128xf32>,
    return
  }
  func.func @transform_0(%arg0: i32) -> (i32, i32) {
    %c0_i32 = arith.constant 0 : i32
    %c0_i32_0 = arith.constant 0 : i32
    return %c0_i32, %arg0 : i32, i32
  }
  func.func @transform_1(%arg0: i32) -> (i32, i32) {
    %c0_i32 = arith.constant 0 : i32
    %c0_i32_0 = arith.constant 0 : i32
    %c0_i32_1 = arith.constant 0 : i32
    return %c0_i32, %c0_i32_0 : i32, i32
  }
  func.func @transform_2(%arg0: i32) -> (i32, i32) {
    %c0_i32 = arith.constant 0 : i32
    %c0_i32_0 = arith.constant 0 : i32
    %c0_i32_1 = arith.constant 0 : i32
    return %c0_i32, %c0_i32_0 : i32, i32
  }
  func.func @transform_3(%arg0: i32) -> (i32, i32) {
    %c0_i32 = arith.constant 0 : i32
    %c0_i32_0 = arith.constant 0 : i32
    return %c0_i32, %arg0 : i32, i32
  }
}

</mosaic_0001>

<llo_original>
// kernel: tpu_custom_call.1
$region0: #{tpu_custom_call.1}
  #allocation0 [shape = 'u32[]', space=smem, size = 0x4, offset = 0x4, fixed_abs, tag = 'smem constant byte address 0x4 - core index']
  #allocation1 [shape = 'u32[144,128]{1,0:T(1,128)}', space=vmem, size = 0x12000, scoped, tag = 'internal scratch']
  %s0 = inlined_call_operand.vmem [shape: f32[4,128], index: 0, kind: input, shape index: {}]
  %s1 = inlined_call_operand.vmem [shape: f32[8,4], index: 1, kind: input, shape index: {}]
  %s2 = inlined_call_operand.vmem [shape: f32[8,1], index: 2, kind: input, shape index: {}]
  %s3 = inlined_call_operand.hbm [shape: f32[8,128], index: 3, kind: output, shape index: {}]
  %s4 = sld [smem:[#allocation0]]
  $region22: #{tpu_custom_call.1} parent=0
    _
  %s6 = ssub.s32 1, %s4
  %s7 = scalar_select 0, %s6, %s4
  $region1: #{tpu_custom_call.1} parent=0
    #allocation2 [shape = 'u8[4096]{0}', space=vmem, size = 0x1000, scoped, tag = 'output window, operand 0, single buffered']
    #allocation3 [shape = 's32[1]{0}', space=sflag, size = 0x4, scoped, tag = 'scoped memory for tpu_custom_call.1']
    %8 = vsyncpa [#allocation3], 0
    // Predicated region
    $region2: #{tpu_custom_call.1} parent=1 // pred_check
      _
    $region3: #{tpu_custom_call.1} parent=1 // pred_check_branch
      %10 = sbr.rel (0) target = $region5
    $region4: #{tpu_custom_call.1} parent=1 // pred_region
      _
    $region5: #{tpu_custom_call.1} parent=1 // pred_fallthru
      _
    // Predicated region
    $region6: #{tpu_custom_call.1} parent=1 // pred_check
      _
    $region7: #{tpu_custom_call.1} parent=1 // pred_check_branch
      %12 = sbr.rel (0) target = $region9
    $region8: #{tpu_custom_call.1} parent=1 // pred_region
      _
    $region9: #{tpu_custom_call.1} parent=1 // pred_fallthru
      _
    // Predicated region
    $region10: #{tpu_custom_call.1} parent=1 // pred_check
      _
    $region11: #{tpu_custom_call.1} parent=1 // pred_check_branch
      %14 = sbr.rel (0) target = $region13
    $region12: #{tpu_custom_call.1} parent=1 // pred_region
      _
    $region13: #{tpu_custom_call.1} parent=1 // pred_fallthru
      _
    %v15 = vld [vmem:[%s1] sm:$0xff]
    %v16 = vld [vmem:[%s0] sm:$0xf]
    %v17 = vld [vmem:[%s2] sm:$0xff]
    %19 = vset.pattern.permute.xlu0 0
    %20 = vperm.xlu0 %19, %v17
    %v21 = vpop.permute.xlu0 %20
    %vm23 = vcmask 31744
    %v25 = vsel %vm23, %v15, 0
    %vm27 = vcmask 1043456
    %v29 = vsel %vm27, %v16, 0
    %31 = vmatprep.subr.mxu0 0.0
    %32 = vmatpush1.msra.mxu0 %v29
    %33 = vmatprep.subr.mxu0 0.0
    %34 = vmatpush1.msra.mxu0 0.0
    %35 = vmatprep.subr.mxu0 0.0
    %36 = vmatpush1.msra.mxu0 0.0
    %37 = vmatprep.subr.mxu0 0.0
    %38 = vmatpush1.msra.mxu0 0.0
    %39 = vmatprep.subr.mxu0 0.0
    %40 = vmatpush1.msra.mxu0 0.0
    %41 = vmatprep.subr.mxu0 0.0
    %42 = vmatpush1.msra.mxu0 0.0
    %43 = vmatprep.subr.mxu0 0.0
    %44 = vmatpush1.msra.mxu0 0.0
    %45 = vmatprep.subr.mxu0 0.0
    %46 = vmatpush1.msra.mxu0 0.0
    %47 = vmatprep.subr.mxu0 0.0
    %48 = vmatpush1.msra.mxu0 0.0
    %49 = vmatprep.subr.mxu0 0.0
    %50 = vmatpush1.msra.mxu0 0.0
    %51 = vmatprep.subr.mxu0 0.0
    %52 = vmatpush1.msra.mxu0 0.0
    %53 = vmatprep.subr.mxu0 0.0
    %54 = vmatpush1.msra.mxu0 0.0
    %55 = vmatprep.subr.mxu0 0.0
    %56 = vmatpush1.msra.mxu0 0.0
    %57 = vmatprep.subr.mxu0 0.0
    %58 = vmatpush1.msra.mxu0 0.0
    %59 = vmatprep.subr.mxu0 0.0
    %60 = vmatpush1.msra.mxu0 0.0
    %61 = vmatprep.subr.mxu0 0.0
    %62 = vmatpush1.msra.mxu0 0.0
    %63 = vmatprep.subr.mxu0 0.0
    %64 = vmatpush1.msra.mxu0 0.0
    %65 = vmatprep.subr.mxu0 0.0
    %66 = vmatpush1.msra.mxu0 0.0
    %67 = vmatprep.subr.mxu0 0.0
    %68 = vmatpush1.msra.mxu0 0.0
    %69 = vmatprep.subr.mxu0 0.0
    %70 = vmatpush1.msra.mxu0 0.0
    %71 = vmatprep.subr.mxu0 0.0
    %72 = vmatpush1.msra.mxu0 0.0
    %73 = vmatprep.subr.mxu0 0.0
    %74 = vmatpush1.msra.mxu0 0.0
    %75 = vmatprep.subr.mxu0 0.0
    %76 = vmatpush1.msra.mxu0 0.0
    %77 = vmatprep.subr.mxu0 0.0
    %78 = vmatpush1.msra.mxu0 0.0
    %79 = vmatprep.subr.mxu0 0.0
    %80 = vmatpush1.msra.mxu0 0.0
    %81 = vmatprep.subr.mxu0 0.0
    %82 = vmatpush1.msra.mxu0 0.0
    %83 = vmatprep.subr.mxu0 0.0
    %84 = vmatpush1.msra.mxu0 0.0
    %85 = vmatprep.subr.mxu0 0.0
    %86 = vmatpush1.msra.mxu0 0.0
    %87 = vmatprep.subr.mxu0 0.0
    %88 = vmatpush1.msra.mxu0 0.0
    %89 = vmatprep.subr.mxu0 0.0
    %90 = vmatpush1.msra.mxu0 0.0
    %91 = vmatprep.subr.mxu0 0.0
    %92 = vmatpush1.msra.mxu0 0.0
    %93 = vmatprep.subr.mxu0 0.0
    %94 = vmatpush1.msra.mxu0 0.0
    %95 = vmatprep.mubr.f32.mxu0 0.0
    %96 = vmatmul.mubr.f32.gmra.mrb[0].mxu0 %v25
    %v97 = vpop.f32.mrb[0].mxu0
    %v98 = vadd.f32 %v21, %v97
    %v99 = vpop.f32.mrb[0].mxu0
    %100 = vdwg.mxu0
    %v101 = vmax.f32 %v98, 0.0
    %102 = vst [vmem:[#allocation2] sm:$0xff] %v101
    // Predicated region
    $region14: #{tpu_custom_call.1} parent=1 // pred_check
      _
    $region15: #{tpu_custom_call.1} parent=1 // pred_check_branch
      %104 = sbr.rel (0) target = $region17
    $region16: #{tpu_custom_call.1} parent=1 // pred_region
      %s106 = ssub.s32 128, 128
      %107 = vsyncadd [#allocation3], %s106
      %s109 = sshll.u32 [#allocation2], 4
      %s110 = int_to_ptr.vmem [resolvable:$true] %s109
      %112 = dma.vmem_to_hbm [thread:$0]  %s110, 128, %s3, [#allocation3]
    $region17: #{tpu_custom_call.1} parent=1 // pred_fallthru
      _
    // Predicated region
    $region18: #{tpu_custom_call.1} parent=1 // pred_check
      _
    $region19: #{tpu_custom_call.1} parent=1 // pred_check_branch
      %114 = sbr.rel (0) target = $region21
    $region20: #{tpu_custom_call.1} parent=1 // pred_region
      %115 = dma.done [#allocation3], 128
    $region21: #{tpu_custom_call.1} parent=1 // pred_fallthru
      _
    %116 = vsyncpa [#allocation3], 1

</llo_original>
